<compile_context>
chip_gen: v7x
topology: tpu7x:2x2x1
jax: 0.10.0
libtpu: 0.0.40
codegen_flags: <defaults>
</compile_context>

<pallas_src>
import functools
import math

import jax
import jax.numpy as jnp
from jax import lax
from jax.experimental import pallas as pl
from jax.experimental.pallas import tpu as pltpu

LANE = 128           # lane width
MAX_BLOCK_R = 2048   # rows per block: 2048 * 128 * 4B = 1 MiB per f32 buffer


def minmax_kernel(x_ref, mm_ref, min_acc, max_acc, *, n_valid, block_r, needs_mask):
    """Grid reduction: elementwise VMEM accumulators, final reduce at last step."""
    i = pl.program_id(0)

    @pl.when(i == 0)
    def _():
        min_acc[...] = jnp.full((block_r, LANE), jnp.inf, jnp.float32)
        max_acc[...] = jnp.full((block_r, LANE), -jnp.inf, jnp.float32)

    x = x_ref[...].astype(jnp.float32)

    if needs_mask:
        # Mask out elements past the logical end of the tensor (ragged tail and/or
        # the out-of-bounds padding of a partial last block) with min/max-neutral values.
        r_idx = lax.broadcasted_iota(jnp.int32, (block_r, LANE), 0)
        l_idx = lax.broadcasted_iota(jnp.int32, (block_r, LANE), 1)
        gidx = (i * block_r + r_idx) * LANE + l_idx
        valid = gidx < n_valid
        x_min = jnp.where(valid, x, jnp.inf)
        x_max = jnp.where(valid, x, -jnp.inf)
    else:
        x_min = x
        x_max = x

    # Elementwise accumulate (VPU only) -- no per-step XLU reduce, no SMEM RMW.
    min_acc[...] = jnp.minimum(min_acc[...], x_min)
    max_acc[...] = jnp.maximum(max_acc[...], x_max)

    @pl.when(i == pl.num_programs(0) - 1)
    def _():
        mm_ref[0] = jnp.min(min_acc[...])
        mm_ref[1] = jnp.max(max_acc[...])


def quant_kernel(mm_ref, x_ref, o_ref, *, n_bits, sym, factor):
    """Elementwise fake-quantize using the global min/max scalars (SMEM)."""
    raw_min = mm_ref[0]
    raw_max = mm_ref[1]

    # PyTorch module returns x unchanged if min == max.
    is_const = raw_min == raw_max

    # ---- scalar-only math (once per grid step) ----
    mn = factor * raw_min
    mx = factor * raw_max

    if sym:
        sign = raw_min < 0.0
        qmin = jnp.where(sign, -(2.0 ** (n_bits - 1)), 0.0)
        qmax = jnp.where(sign, 2.0 ** (n_bits - 1) - 1.0, 2.0 ** n_bits - 1.0)
        max_abs = jnp.maximum(jnp.abs(mn), jnp.abs(mx))
        delta = 2.0 * max_abs / (2.0 ** n_bits - 1.0)
        safe_delta = jnp.where(delta == 0.0, 1.0, delta)
        inv_delta = 1.0 / safe_delta          # scalar reciprocal, per-element multiply below
        zp = 0.0
        lo, hi = qmin, qmax
    else:
        qmax = 2.0 ** n_bits - 1.0
        delta = (mx - mn) / qmax
        safe_delta = jnp.where(delta == 0.0, 1.0, delta)
        inv_delta = 1.0 / safe_delta
        zp = mn
        lo, hi = 0.0, qmax

    # ---- elementwise region (VPU, hidden under DMA) ----
    x = x_ref[...].astype(jnp.float32)
    X = jnp.round((x - zp) * inv_delta)
    y = safe_delta * jnp.clip(X, lo, hi) + zp

    o_ref[...] = jnp.where(is_const, x, y).astype(o_ref.dtype)


def dynamic_activation_fake_quantize(x, n_bits=8, sym=False, factor=0.99):
    """Forward pass of DynamicActivationFakeQuantize (per-tensor dynamic fake quant)."""
    orig_shape = x.shape
    orig_dtype = x.dtype
    n = int(math.prod(orig_shape))
    if n == 0:
        return x

    xf = x.reshape(-1)                         # no dtype cast here (cast in-kernel)
    rows = pl.cdiv(n, LANE)
    padded_n = rows * LANE
    pad = padded_n - n
    if pad:
        # Only the tiny remainder needed to reach a multiple of the lane width.
        xf = jnp.pad(xf, (0, pad))
    x2 = xf.reshape(rows, LANE)

    block_r = rows if rows <= MAX_BLOCK_R else MAX_BLOCK_R
    grid_steps = pl.cdiv(rows, block_r)
    needs_mask = (rows % block_r != 0) or (pad != 0)

    # ---- kernel 1: global min / max reduction (sequential accumulation) ----
    mm = pl.pallas_call(
        functools.partial(minmax_kernel, n_valid=n, block_r=block_r,
                          needs_mask=needs_mask),
        out_shape=jax.ShapeDtypeStruct((2,), jnp.float32),
        grid=(grid_steps,),
        in_specs=[pl.BlockSpec((block_r, LANE), lambda i: (i, 0))],
        out_specs=pl.BlockSpec(memory_space=pltpu.SMEM),
        scratch_shapes=[pltpu.VMEM((block_r, LANE), jnp.float32),
                        pltpu.VMEM((block_r, LANE), jnp.float32)],
        compiler_params=pltpu.CompilerParams(
            dimension_semantics=("arbitrary",),          # accumulation must stay sequential
            vmem_limit_bytes=32 * 1024 * 1024),
    )(x2)

    # ---- kernel 2: elementwise fake quantize (independent per tile -> parallel) ----
    y2 = pl.pallas_call(
        functools.partial(quant_kernel, n_bits=n_bits, sym=sym, factor=factor),
        out_shape=jax.ShapeDtypeStruct(x2.shape, orig_dtype),
        grid=(grid_steps,),
        in_specs=[
            pl.BlockSpec(memory_space=pltpu.SMEM),
            pl.BlockSpec((block_r, LANE), lambda i: (i, 0)),
        ],
        out_specs=pl.BlockSpec((block_r, LANE), lambda i: (i, 0)),
        compiler_params=pltpu.CompilerParams(
            dimension_semantics=("parallel",),
            vmem_limit_bytes=32 * 1024 * 1024),
    )(mm, x2)

    y = y2.reshape(-1)[:n].reshape(orig_shape)
    return y


def _reference(x, n_bits=8, sym=False, factor=0.99):
    """Pure-JAX reference matching the PyTorch forward (sym / asym paths)."""
    x = x.astype(jnp.float32)
    raw_min = jnp.min(x)
    raw_max = jnp.max(x)
    mn = factor * raw_min
    mx = factor * raw_max
    if sym:
        sign = raw_min < 0.0
        qmin = jnp.where(sign, -(2.0 ** (n_bits - 1)), 0.0)
        qmax = jnp.where(sign, 2.0 ** (n_bits - 1) - 1.0, 2.0 ** n_bits - 1.0)
        max_abs = jnp.maximum(jnp.abs(mn), jnp.abs(mx))
        delta = 2.0 * max_abs / (2.0 ** n_bits - 1.0)
        sd = jnp.where(delta == 0.0, 1.0, delta)
        y = sd * jnp.clip(jnp.round(x * (1.0 / sd)), qmin, qmax)
    else:
        qmax = 2.0 ** n_bits - 1.0
        delta = (mx - mn) / qmax
        sd = jnp.where(delta == 0.0, 1.0, delta)
        y = sd * jnp.clip(jnp.round((x - mn) * (1.0 / sd)), 0.0, qmax) + mn
    return jnp.where(raw_min == raw_max, x, y)


if __name__ == "__main__":
    key = jax.random.PRNGKey(0)
    # NCHW-style activation tensor, like a conv feature map
    x = jax.random.normal(key, (2, 4, 16, 16), dtype=jnp.float32) * 3.0 + 0.5

    # default module config: n_bits=8, sym=False, factor=0.99
    y = dynamic_activation_fake_quantize(x, n_bits=8, sym=False, factor=0.99)
    y = jax.block_until_ready(y)

    y_ref = _reference(x, n_bits=8, sym=False, factor=0.99)
    assert y.shape == x.shape and y.dtype == x.dtype
    assert jnp.allclose(y, y_ref, atol=1e-5, rtol=1e-5), "asym mismatch vs reference"

    # also sanity-check the symmetric path
    y_sym = dynamic_activation_fake_quantize(x, n_bits=8, sym=True, factor=0.99)
    y_sym = jax.block_until_ready(y_sym)
    y_sym_ref = _reference(x, n_bits=8, sym=True, factor=0.99)
    assert jnp.allclose(y_sym, y_sym_ref, atol=1e-5, rtol=1e-5), "sym mismatch"

    # TODO(synk): grad_scale / round_ste are straight-through-estimator tricks that are
    # identity in the forward pass; only the forward is implemented here.
    print("KERNEL_OK")
</pallas_src>

<mosaic_0001>
module attributes {stable_mosaic.version = 11 : i64} {
  func.func @minmax_kernel(%arg0: i32, %arg1: memref<16x128xf32, #tpu.memory_space<vmem>>, %arg2: memref<2xf32, #tpu.memory_space<smem>>, %arg3: memref<16x128xf32, #tpu.memory_space<vmem>>, %arg4: memref<16x128xf32, #tpu.memory_space<vmem>>) attributes {dimension_semantics = [#tpu.dimension_semantics<arbitrary>], iteration_bounds = array<i64: 1>, scalar_prefetch = 0 : i64, scratch_operands = 2 : i64, tpu.core_type = #tpu.core_type<tc>, window_params = [{transform_indices = @transform_0, window_bounds = array<i64: 16, 128>}, {transform_indices = @transform_1, window_bounds = array<i64: 2>}]} {
    %c0_i32 = arith.constant 0 : i32
    %0 = arith.cmpi eq, %arg0, %c0_i32 : i32
    %1 = arith.extui %0 : i1 to i32
    %c0_i32_0 = arith.constant 0 : i32
    %2 = arith.cmpi ne, %1, %c0_i32_0 : i32
    scf.if %2 {
      %cst = arith.constant 0x7F800000 : f32
      %13 = vector.broadcast %cst : f32 to vector<16x128xf32>
      %c0_12 = arith.constant 0 : index
      %c0_13 = arith.constant 0 : index
      %14 = vector.load %arg3[%c0_12, %c0_13] : memref<16x128xf32, #tpu.memory_space<vmem>>, vector<16x128xf32>
      tpu.vector_store %arg3[%c0_12, %c0_13], %13 {strides = array<i32>} : memref<16x128xf32, #tpu.memory_space<vmem>>, vector<16x128xf32>,
      %cst_14 = arith.constant 0xFF800000 : f32
      %15 = vector.broadcast %cst_14 : f32 to vector<16x128xf32>
      %c0_15 = arith.constant 0 : index
      %c0_16 = arith.constant 0 : index
      %16 = vector.load %arg4[%c0_15, %c0_16] : memref<16x128xf32, #tpu.memory_space<vmem>>, vector<16x128xf32>
      tpu.vector_store %arg4[%c0_15, %c0_16], %15 {strides = array<i32>} : memref<16x128xf32, #tpu.memory_space<vmem>>, vector<16x128xf32>,
    } else {
    }
    %c0 = arith.constant 0 : index
    %c0_1 = arith.constant 0 : index
    %3 = vector.load %arg1[%c0, %c0_1] : memref<16x128xf32, #tpu.memory_space<vmem>>, vector<16x128xf32>
    %c0_2 = arith.constant 0 : index
    %c0_3 = arith.constant 0 : index
    %4 = vector.load %arg3[%c0_2, %c0_3] : memref<16x128xf32, #tpu.memory_space<vmem>>, vector<16x128xf32>
    %5 = arith.minimumf %4, %3 : vector<16x128xf32>
    %c0_4 = arith.constant 0 : index
    %c0_5 = arith.constant 0 : index
    %6 = vector.load %arg3[%c0_4, %c0_5] : memref<16x128xf32, #tpu.memory_space<vmem>>, vector<16x128xf32>
    tpu.vector_store %arg3[%c0_4, %c0_5], %5 {strides = array<i32>} : memref<16x128xf32, #tpu.memory_space<vmem>>, vector<16x128xf32>,
    %c0_6 = arith.constant 0 : index
    %c0_7 = arith.constant 0 : index
    %7 = vector.load %arg4[%c0_6, %c0_7] : memref<16x128xf32, #tpu.memory_space<vmem>>, vector<16x128xf32>
    %8 = arith.maximumf %7, %3 : vector<16x128xf32>
    %c0_8 = arith.constant 0 : index
    %c0_9 = arith.constant 0 : index
    %9 = vector.load %arg4[%c0_8, %c0_9] : memref<16x128xf32, #tpu.memory_space<vmem>>, vector<16x128xf32>
    tpu.vector_store %arg4[%c0_8, %c0_9], %8 {strides = array<i32>} : memref<16x128xf32, #tpu.memory_space<vmem>>, vector<16x128xf32>,
    %c0_i32_10 = arith.constant 0 : i32
    %10 = arith.cmpi eq, %arg0, %c0_i32_10 : i32
    %11 = arith.extui %10 : i1 to i32
    %c0_i32_11 = arith.constant 0 : i32
    %12 = arith.cmpi ne, %11, %c0_i32_11 : i32
    scf.if %12 {
      %c0_12 = arith.constant 0 : index
      %c0_13 = arith.constant 0 : index
      %13 = vector.load %arg3[%c0_12, %c0_13] : memref<16x128xf32, #tpu.memory_space<vmem>>, vector<16x128xf32>
      %14 = vector.shape_cast %13 : vector<16x128xf32> to vector<1x16x128xf32>
      %cst = arith.constant dense<0x7F800000> : vector<1xf32>
      %15 = vector.multi_reduction <minimumf>, %14, %cst [1, 2] : vector<1x16x128xf32> to vector<1xf32>
      %16 = vector.shape_cast %15 : vector<1xf32> to vector<1x1x1xf32>
      %17 = vector.extract %16[0, 0, 0] : f32 from vector<1x1x1xf32>
      %c0_14 = arith.constant 0 : index
      %18 = memref.load %arg2[%c0_14] : memref<2xf32, #tpu.memory_space<smem>>
      memref.store %17, %arg2[%c0_14] : memref<2xf32, #tpu.memory_space<smem>>
      %c0_15 = arith.constant 0 : index
      %c0_16 = arith.constant 0 : index
      %19 = vector.load %arg4[%c0_15, %c0_16] : memref<16x128xf32, #tpu.memory_space<vmem>>, vector<16x128xf32>
      %20 = vector.shape_cast %19 : vector<16x128xf32> to vector<1x16x128xf32>
      %cst_17 = arith.constant dense<0xFF800000> : vector<1xf32>
      %21 = vector.multi_reduction <maximumf>, %20, %cst_17 [1, 2] : vector<1x16x128xf32> to vector<1xf32>
      %22 = vector.shape_cast %21 : vector<1xf32> to vector<1x1x1xf32>
      %23 = vector.extract %22[0, 0, 0] : f32 from vector<1x1x1xf32>
      %c1 = arith.constant 1 : index
      %24 = memref.load %arg2[%c1] : memref<2xf32, #tpu.memory_space<smem>>
      memref.store %23, %arg2[%c1] : memref<2xf32, #tpu.memory_space<smem>>
    } else {
    }
    return
  }
  func.func @transform_0(%arg0: i32) -> (i32, i32) {
    %c0_i32 = arith.constant 0 : i32
    %c0_i32_0 = arith.constant 0 : i32
    return %arg0, %c0_i32 : i32, i32
  }
  func.func @transform_1(%arg0: i32) -> i32 {
    %c0_i32 = arith.constant 0 : i32
    %c0_i32_0 = arith.constant 0 : i32
    return %c0_i32 : i32
  }
}

</mosaic_0001>

<llo_original>
// kernel: tpu_custom_call.1
$region0: #{tpu_custom_call.1}
  #allocation0 [shape = 'u32[]', space=smem, size = 0x4, offset = 0x4, fixed_abs, tag = 'smem constant byte address 0x4 - core index']
  #allocation1 [shape = 'u32[144,128]{1,0:T(1,128)}', space=vmem, size = 0x12000, scoped, tag = 'internal scratch']
  #allocation2 [shape = 'f32[16,128]{1,0:T(8,128)}', space=vmem, size = 0x2000, scoped, tag = 'scratch operand']
  #allocation3 [shape = 'f32[16,128]{1,0:T(8,128)}', space=vmem, size = 0x2000, scoped, tag = 'scratch operand']
  %s0 = inlined_call_operand.hbm [shape: f32[16,128], index: 0, kind: input, shape index: {}]
  %s1 = inlined_call_operand.hbm [shape: f32[2], index: 1, kind: output, shape index: {}]
  %s2 = sld [smem:[#allocation0]]
  $region26: #{tpu_custom_call.1} parent=0
    _
  %s4 = ssub.s32 1, %s2
  %s5 = scalar_select 0, %s4, %s2
  $region1: #{tpu_custom_call.1} parent=0
    #allocation4 [shape = 'u8[8192]{0}', space=vmem, size = 0x2000, scoped, tag = 'input window, operand 0, single buffered']
    #allocation5 [shape = 's32[1]{0}', space=sflag, size = 0x4, scoped, tag = 'scoped memory for tpu_custom_call.1']
    #allocation6 [shape = 's32[1]{0}', space=sflag, size = 0x4, scoped, tag = 'scoped memory for tpu_custom_call.1']
    #allocation7 [shape = 'u8[512]{0}', space=smem, size = 0x200, scoped, tag = 'output window, operand 0, single buffered']
    %6 = vsyncpa [#allocation5], 0
    %7 = vsyncpa [#allocation6], 0
    // Predicated region
    $region2: #{tpu_custom_call.1} parent=1 // pred_check
      _
    $region3: #{tpu_custom_call.1} parent=1 // pred_check_branch
      %9 = sbr.rel (0) target = $region5
    $region4: #{tpu_custom_call.1} parent=1 // pred_region
      %s11 = ssub.s32 256, 256
      %12 = vsyncadd [#allocation5], %s11
      %s13 = sshll.u32 [#allocation4], 4
      %s14 = int_to_ptr.vmem [resolvable:$true] %s13
      %19 = dma.hbm_to_vmem [thread:$0]  %s0, 256, %s14, [#allocation5], 128, 128, 8
    $region5: #{tpu_custom_call.1} parent=1 // pred_fallthru
      _
    // Predicated region
    $region6: #{tpu_custom_call.1} parent=1 // pred_check
      _
    $region7: #{tpu_custom_call.1} parent=1 // pred_check_branch
      %21 = sbr.rel (0) target = $region9
    $region8: #{tpu_custom_call.1} parent=1 // pred_region
      %22 = dma.done [#allocation5], 256
    $region9: #{tpu_custom_call.1} parent=1 // pred_fallthru
      _
    %p23 = scmp.eq.s32.totalorder 0, 0
    // Predicated region
    $region10: #{tpu_custom_call.1} parent=1 // pred_check
      %p24 = pneg %p23
    $region11: #{tpu_custom_call.1} parent=1 // pred_check_branch
      %26 = sbr.rel (%p24) target = $region13
    $region12: #{tpu_custom_call.1} parent=1 // pred_region
      %27 = vst [vmem:[#allocation2] sm:$0xff] inf
      %28 = vst [vmem:[#allocation2 + $0x8] sm:$0xff] inf
      %29 = vst [vmem:[#allocation3] sm:$0xff] -inf
      %30 = vst [vmem:[#allocation3 + $0x8] sm:$0xff] -inf
    $region13: #{tpu_custom_call.1} parent=1 // pred_fallthru
      _
    %v31 = vld [vmem:[#allocation4] sm:$0xff]
    %v32 = vld [vmem:[#allocation4 + $0x8] sm:$0xff]
    %v33 = vld [vmem:[#allocation2] sm:$0xff]
    %v34 = vld [vmem:[#allocation2 + $0x8] sm:$0xff]
    %v35 = vmin.f32 %v33, %v31
    %v36 = vmin.f32 %v34, %v32
    %37 = vst [vmem:[#allocation2] sm:$0xff] %v35
    %38 = vst [vmem:[#allocation2 + $0x8] sm:$0xff] %v36
    %v39 = vld [vmem:[#allocation3] sm:$0xff]
    %v40 = vld [vmem:[#allocation3 + $0x8] sm:$0xff]
    %v41 = vmax.f32 %v39, %v31
    %v42 = vmax.f32 %v40, %v32
    %43 = vst [vmem:[#allocation3] sm:$0xff] %v41
    %44 = vst [vmem:[#allocation3 + $0x8] sm:$0xff] %v42
    // Predicated region
    $region14: #{tpu_custom_call.1} parent=1 // pred_check
      %p45 = pneg %p23
    $region15: #{tpu_custom_call.1} parent=1 // pred_check_branch
      %47 = sbr.rel (%p45) target = $region17
    $region16: #{tpu_custom_call.1} parent=1 // pred_region
      %v48 = vld [vmem:[#allocation2] sm:$0xff]
      %v49 = vld [vmem:[#allocation2 + $0x8] sm:$0xff]
      %v50 = vmin.f32 %v48, %v49
      %51 = vmin.xlane.f32.xlu0 %v50
      %v52 = vpop.xlane.xlu0 %51
      %v53 = vrot.slane %v52, 4
      %v54 = vmin.f32 %v52, %v53
      %v55 = vrot.slane %v54, 2
      %v56 = vmin.f32 %v54, %v55
      %v57 = vrot.slane %v56, 1
      %v58 = vmin.f32 %v56, %v57
      %s59 = vtos %v58
      %s60 = scalar_lea.smem [#allocation7], 0
      %61 = sst [smem:[%s60]] %s59
      %v62 = vld [vmem:[#allocation3] sm:$0xff]
      %v63 = vld [vmem:[#allocation3 + $0x8] sm:$0xff]
      %v64 = vmax.f32 %v62, %v63
      %65 = vmax.xlane.f32.xlu0 %v64
      %v66 = vpop.xlane.xlu0 %65
      %v67 = vrot.slane %v66, 4
      %v68 = vmax.f32 %v66, %v67
      %v69 = vrot.slane %v68, 2
      %v70 = vmax.f32 %v68, %v69
      %v71 = vrot.slane %v70, 1
      %v72 = vmax.f32 %v70, %v71
      %s73 = vtos %v72
      %s74 = scalar_lea.smem [#allocation7], 1
      %75 = sst [smem:[%s74]] %s73
    $region17: #{tpu_custom_call.1} parent=1 // pred_fallthru
      _
    // Predicated region
    $region18: #{tpu_custom_call.1} parent=1 // pred_check
      _
    $region19: #{tpu_custom_call.1} parent=1 // pred_check_branch
      %77 = sbr.rel (0) target = $region21
    $region20: #{tpu_custom_call.1} parent=1 // pred_region
      %s79 = ssub.s32 16, 16
      %80 = vsyncadd [#allocation6], %s79
      %83 = dma.smem_to_hbm [#allocation7], 16, %s1, [#allocation6]
    $region21: #{tpu_custom_call.1} parent=1 // pred_fallthru
      _
    // Predicated region
    $region22: #{tpu_custom_call.1} parent=1 // pred_check
      _
    $region23: #{tpu_custom_call.1} parent=1 // pred_check_branch
      %85 = sbr.rel (0) target = $region25
    $region24: #{tpu_custom_call.1} parent=1 // pred_region
      %86 = dma.done [#allocation6], 16
    $region25: #{tpu_custom_call.1} parent=1 // pred_fallthru
      _
    %87 = sfence
    %88 = vsyncpa [#allocation5], 1
    %89 = vsyncpa [#allocation6], 1

</llo_original>
